<compile_context>
chip_gen: v5e
topology: v5e:2x2
jax: 0.10.0
libtpu: 0.0.40
codegen_flags: <defaults>
</compile_context>

<pallas_src>
import functools

import numpy as np
import jax
import jax.numpy as jnp
from jax.experimental import pallas as pl
from jax.experimental.pallas import tpu as pltpu


# ----------------------------- Pallas kernels ------------------------------ #

def _ff_matmul_kernel(w_ref, x_ref, o_ref):
    # Simple path: full (H, H) operator resident in VMEM (single-buffered).
    # x_ref / o_ref: (H, TW) lane-dense slab tiles, TW a multiple of 128.
    o_ref[...] = jnp.dot(
        w_ref[...], x_ref[...], preferred_element_type=jnp.float32
    ).astype(o_ref.dtype)


def _ff_kblocked_kernel(w_ref, x_ref, o_ref, acc_ref):
    # Fallback for very large H: contraction (K) axis tiled, f32 accumulator
    # kept in VMEM, output stored on the last K step (standard P3 pattern).
    k = pl.program_id(1)

    @pl.when(k == 0)
    def _():
        acc_ref[...] = jnp.zeros_like(acc_ref)

    acc_ref[...] += jnp.dot(
        w_ref[...], x_ref[...], preferred_element_type=jnp.float32)

    @pl.when(k == pl.num_programs(1) - 1)
    def _():
        o_ref[...] = acc_ref[...].astype(o_ref.dtype)


# -------------------------- operator construction -------------------------- #

def _gaussian_kernel1d_np(ksize, sigma):
    # Matches kornia.filters.get_gaussian_kernel1d.
    xs = np.arange(ksize, dtype=np.float64) - ksize // 2
    if ksize % 2 == 0:
        xs = xs + 0.5
    g = np.exp(-(xs ** 2) / (2.0 * float(sigma) ** 2))
    return g / g.sum()


@functools.lru_cache(maxsize=None)
def build_filter_matrix(H, f_th, sig):
    """Real (H, H) operator equal to: irfft(mask_lf*rfft(.)) +
    gauss_blur_H(irfft(mask_hf*rfft(.))) along the H axis. Host-side numpy,
    cached per (H, f_th, sig)."""
    # TODO(synk): odd H (diff>0 reflect pad after irfft) not implemented.
    assert H % 2 == 0, "even H assumed: irfft length == H, final reflect-pad is a no-op"

    freqs = np.fft.rfftfreq(H, d=2.0)                       # torch.fft.rfftfreq(H, 2)
    eye = np.eye(H, dtype=np.float64)
    F = np.fft.rfft(eye, axis=0)                            # (H//2+1, H) complex
    m_hf = (freqs > f_th).astype(np.float64)[:, None]
    m_lf = (freqs < f_th).astype(np.float64)[:, None]
    M_hf = np.fft.irfft(F * m_hf, n=H, axis=0)              # (H, H)
    M_lf = np.fft.irfft(F * m_lf, n=H, axis=0)              # (H, H)

    # kornia gaussian_blur2d with kernel_size=(kh, 1), sigma=(sig, 0.001),
    # border_type='reflect'. Width kernel is [1.0] -> identity along W, so
    # only the H-axis blur matrix is needed.
    kh = int(5 * sig) + 1
    # TODO(synk): even kh (e.g. sig=1.0) uses asymmetric padding in kornia; not supported.
    assert kh % 2 == 1, "even gaussian kernel size not supported"
    pad = kh // 2
    assert pad < H, "blur kernel wider than H (single reflection invalid)"
    k = _gaussian_kernel1d_np(kh, sig)
    Bm = np.zeros((H, H), dtype=np.float64)
    rows = np.arange(H)
    for t in range(kh):
        j = rows + t - pad
        j = np.where(j < 0, -j, j)                # 'reflect' (no edge repeat)
        j = np.where(j >= H, 2 * H - 2 - j, j)
        np.add.at(Bm, (rows, j), k[t])

    return (M_lf + Bm @ M_hf).astype(np.float32)            # (H, H)


# ------------------------------ tiling helpers ------------------------------ #

def _round_up(a, b):
    return (a + b - 1) // b * b


def _vmem_capacity_bytes():
    try:
        return int(pltpu.get_tpu_info().vmem_capacity_bytes)
    except Exception:
        return 64 << 20            # conservative fallback: v7x per-TC VMEM


def _resident_block_spec(block_shape, index_map):
    # Single-buffer the resident operator block (constant index_map, never
    # re-fetched).  Fall back to the default double-buffered spec if this
    # jax version rejects pipeline_mode / Buffered(1).
    try:
        return pl.BlockSpec(block_shape, index_map, pipeline_mode=pl.Buffered(1))
    except Exception:
        return pl.BlockSpec(block_shape, index_map)


_MIN_BLOCK_BYTES = 1 << 20         # ~1 MiB blocks amortize the ~0.35us/step cost


def _plan_tiles(H, L, itemsize, cap_bytes, force_kblock_tk=None):
    """Pick lane tile TW (and contraction tile TK for the fallback path)."""
    lane_target = max(512, _round_up(pl.cdiv(_MIN_BLOCK_BYTES, H * itemsize), 128))
    TW = min(lane_target, _round_up(max(L, 1), 128))

    # Prefer >= 2 grid steps along the "parallel" lane axis when the halves
    # are still large blocks, so both TensorCores get work on v7x.
    if pl.cdiv(L, TW) < 2:
        half = _round_up(pl.cdiv(L, 2), 128)
        if half < TW and H * half * itemsize >= _MIN_BLOCK_BYTES // 2:
            TW = half

    def simple_budget(tw):
        return (H * H * itemsize           # operator, resident, single-buffered
                + 2 * H * tw * itemsize    # input block, double-buffered
                + 2 * H * tw * itemsize)   # output block, double-buffered

    use_kblock = (force_kblock_tk is not None) or simple_budget(128) > cap_bytes
    if not use_kblock:
        while TW > 128 and simple_budget(TW) > cap_bytes:
            TW = max(128, _round_up(TW // 2, 128))
        return {"kind": "simple", "TW": TW, "needed": simple_budget(TW)}

    # K-blocked fallback: the (H, H) operator no longer fits next to healthy
    # activation blocks; tile the contraction, accumulate in f32 VMEM.
    def kblock_budget(tk, tw):
        return (2 * H * tk * itemsize      # operator column panel, double-buffered
                + 2 * tk * tw * itemsize   # input block
                + 2 * H * tw * itemsize    # output block
                + H * tw * 4)              # f32 accumulator scratch

    if force_kblock_tk is not None:
        TK = _round_up(int(force_kblock_tk), 128)
    else:
        TK = min(_round_up(H, 128), 1024)
        while TK > 128 and kblock_budget(TK, TW) > cap_bytes:
            TK = max(128, _round_up(TK // 2, 128))
    while TW > 128 and kblock_budget(TK, TW) > cap_bytes:
        TW = max(128, _round_up(TW // 2, 128))
    needed = kblock_budget(TK, TW)
    if needed > cap_bytes and force_kblock_tk is None:
        raise ValueError(
            f"FourierFilter: H={H} exceeds the per-core VMEM budget "
            f"({needed} > {cap_bytes} bytes even at minimal tiles)")
    return {"kind": "kblock", "TW": TW, "TK": TK, "needed": needed}


# ------------------------------- build/cache -------------------------------- #

@functools.lru_cache(maxsize=None)
def _build_fourier_filter(B, C, H, W, x_dtype_name, f_th, sig,
                          compute_dtype_name, vmem_cap_bytes, force_kblock_tk):
    N = B * C
    L = N * W
    compute_dtype = jnp.dtype(compute_dtype_name)
    x_dtype = jnp.dtype(x_dtype_name)
    itemsize = compute_dtype.itemsize

    vmem_total = _vmem_capacity_bytes()
    # Generation-aware budget: ~3/4 of physical VMEM (96 MiB on 128 MiB
    # v5e/v6e parts, 48 MiB on v7x's 64 MiB per-TC VMEM).
    cap = int(vmem_cap_bytes) if vmem_cap_bytes is not None else (3 * vmem_total) // 4
    plan = _plan_tiles(H, L, itemsize, cap, force_kblock_tk)
    TW = plan["TW"]

    w_np = build_filter_matrix(H, f_th, sig)                 # (H, H) float32

    if plan["kind"] == "simple":
        Hk = H
        w_host = w_np
    else:
        TK = plan["TK"]
        Hk = _round_up(H, TK)                                # zero-pad contraction dim
        w_host = np.zeros((H, Hk), dtype=np.float32)
        w_host[:, :H] = w_np

    # vmem limit derived from the actual requirement (+25% margin), never
    # above physical capacity; floor keeps compiler-internal scratch happy.
    vmem_limit = int(min(max(plan["needed"] + plan["needed"] // 4, 32 << 20),
                         vmem_total))

    grid_lanes = pl.cdiv(L, TW)      # ragged last block -> masked stores, no jnp.pad

    if plan["kind"] == "simple":
        grid = (grid_lanes,)
        in_specs = [
            _resident_block_spec((H, H), lambda j: (0, 0)),  # operator, resident
            pl.BlockSpec((H, TW), lambda j: (0, j)),         # lane tile
        ]
        out_specs = pl.BlockSpec((H, TW), lambda j: (0, j))
        kernel = _ff_matmul_kernel
        scratch_shapes = []
        dims = ("parallel",)
    else:
        grid = (grid_lanes, Hk // TK)                        # K innermost ("arbitrary")
        in_specs = [
            pl.BlockSpec((H, TK), lambda j, k: (0, k)),
            pl.BlockSpec((TK, TW), lambda j, k: (k, j)),
        ]
        out_specs = pl.BlockSpec((H, TW), lambda j, k: (0, j))
        kernel = _ff_kblocked_kernel
        scratch_shapes = [pltpu.VMEM((H, TW), jnp.float32)]
        dims = ("parallel", "arbitrary")

    # Alias the slab input to the output (same shape/dtype, same block index
    # per grid step): halves the activation slab's peak HBM footprint.
    aliases = {1: 0} if Hk == H else {}

    # TODO(synk): if "parallel" does not shard the lane axis across v7x's two
    # TensorCores in this jax version, switch it to pltpu.CORE_PARALLEL.
    call = pl.pallas_call(
        kernel,
        out_shape=jax.ShapeDtypeStruct((H, L), compute_dtype),
        grid_spec=pltpu.PrefetchScalarGridSpec(
            num_scalar_prefetch=0,
            grid=grid,
            in_specs=in_specs,
            out_specs=out_specs,
            scratch_shapes=scratch_shapes,
        ),
        compiler_params=pltpu.CompilerParams(
            dimension_semantics=dims,
            vmem_limit_bytes=vmem_limit,
        ),
        input_output_aliases=aliases,
    )

    def impl(x, w):
        # Cast before the layout shuffle so the HBM transpose moves
        # compute_dtype (bf16) bytes instead of f32.
        xs = x.astype(compute_dtype)
        # Lane-dense slab: slab[h, n*W + w] = x[n, h, w].
        slab = xs.reshape(N, H, W).transpose(1, 0, 2).reshape(H, L)
        if Hk != H:                 # K-blocked fallback only: zero-pad contraction dim
            slab = jnp.pad(slab, ((0, Hk - H), (0, 0)))
        out_slab = call(w, slab)
        out = out_slab.reshape(H, N, W).transpose(1, 0, 2).reshape(B, C, H, W)
        return out.astype(x_dtype)

    # TODO(synk): the two wrapper-side HBM transposes are the remaining
    # off-kernel traffic; eliminating them requires the surrounding model to
    # keep the (H, N*W) slab layout across adjacent ops (or an in-kernel XLU
    # transpose), which is out of scope for a standalone module.

    w_dev = jnp.asarray(w_host, dtype=compute_dtype)
    return jax.jit(impl), w_dev


def fourier_filter(x, f_th, sig, compute_dtype=jnp.bfloat16,
                   vmem_cap_bytes=None, _force_kblock_tk=None):
    """irfft(lowpass(rfft_H(x))) + gauss_blur_H(irfft(highpass(rfft_H(x)))).

    compute_dtype defaults to bf16 (memory-bound; also avoids the slow f32 MXU
    path on v5e).  Pass jnp.float32 if bf16 operator quantization matters at
    very large H.  vmem_cap_bytes / _force_kblock_tk are tuning/test knobs.
    """
    B, C, H, W = x.shape
    fn, w = _build_fourier_filter(
        int(B), int(C), int(H), int(W), jnp.dtype(x.dtype).name,
        float(f_th), float(sig), jnp.dtype(compute_dtype).name,
        None if vmem_cap_bytes is None else int(vmem_cap_bytes),
        None if _force_kblock_tk is None else int(_force_kblock_tk))
    return fn(x, w)


# ------------------------------ reference ---------------------------------- #

def _reference(x, f_th, sig):
    H = x.shape[2]
    fft_out = jnp.fft.rfft(x, axis=2)
    freqs = jnp.fft.rfftfreq(H, d=2.0)
    m_hf = (freqs > f_th)[None, None, :, None]
    m_lf = (freqs < f_th)[None, None, :, None]
    out_hf = jnp.fft.irfft(jnp.where(m_hf, fft_out, 0), n=H, axis=2)
    out_lf = jnp.fft.irfft(jnp.where(m_lf, fft_out, 0), n=H, axis=2)
    kh = int(5 * sig) + 1
    pad = kh // 2
    k = jnp.asarray(_gaussian_kernel1d_np(kh, sig), dtype=jnp.float32)
    padded = jnp.pad(out_hf, ((0, 0), (0, 0), (pad, pad), (0, 0)), mode="reflect")
    blurred = sum(k[t] * padded[:, :, t:t + H, :] for t in range(kh))
    return (out_lf + blurred).astype(x.dtype)


if __name__ == "__main__":
    key0, key1 = jax.random.split(jax.random.PRNGKey(0))

    # Small shapes consistent with the module (NCHW, filter along H).
    B, C, H, W = 2, 4, 16, 16
    x = jax.random.normal(key0, (B, C, H, W), dtype=jnp.float32)

    f_th = 0.1      # between rfftfreq(H, d=2) bins -> strict </> well defined
    sig = 0.8       # kernel_size = int(5*0.8)+1 = 5 (odd, valid for kornia)

    ref = _reference(x, f_th, sig)

    # 1) f32 compute path: exact check of the folded operator + simple kernel.
    out_f32 = jax.block_until_ready(
        fourier_filter(x, f_th, sig, compute_dtype=jnp.float32))
    assert out_f32.shape == (B, C, H, W) and out_f32.dtype == x.dtype
    assert jnp.allclose(out_f32, ref, atol=1e-4, rtol=1e-4), "f32 path mismatch"

    # 2) bf16 production path (default).
    out_bf16 = jax.block_until_ready(fourier_filter(x, f_th, sig))
    assert out_bf16.shape == (B, C, H, W) and out_bf16.dtype == x.dtype
    assert jnp.allclose(out_bf16, ref, atol=5e-2, rtol=5e-2), "bf16 path mismatch"

    # 3) K-blocked fallback: forced at modest H so the accumulator path,
    #    contraction-dim zero padding and ragged lane masking are exercised.
    B2, C2, H2, W2 = 1, 3, 192, 48
    x2 = jax.random.normal(key1, (B2, C2, H2, W2), dtype=jnp.float32)
    ref2 = _reference(x2, f_th, sig)
    out2 = jax.block_until_ready(
        fourier_filter(x2, f_th, sig, compute_dtype=jnp.float32,
                       _force_kblock_tk=128))
    assert out2.shape == (B2, C2, H2, W2) and out2.dtype == x2.dtype
    assert jnp.allclose(out2, ref2, atol=1e-3, rtol=1e-3), "k-blocked path mismatch"

    print("KERNEL_OK")
</pallas_src>

<mosaic_0001>
module attributes {stable_mosaic.version = 11 : i64} {
  func.func @_ff_matmul_kernel(%arg0: i32, %arg1: memref<16x16xf32, #tpu.memory_space<vmem>>, %arg2: memref<16x128xf32, #tpu.memory_space<vmem>>, %arg3: memref<16x128xf32, #tpu.memory_space<vmem>>) attributes {dimension_semantics = [#tpu.dimension_semantics<parallel>], iteration_bounds = array<i64: 1>, scalar_prefetch = 0 : i64, scratch_operands = 0 : i64, tpu.core_type = #tpu.core_type<tc>, window_params = [{pipeline_mode = #tpu.pipeline_mode<synchronous>, transform_indices = @transform_0, window_bounds = array<i64: 16, 16>}, {transform_indices = @transform_1, window_bounds = array<i64: 16, 128>}, {transform_indices = @transform_2, window_bounds = array<i64: 16, 128>}]} {
    %c0 = arith.constant 0 : index
    %c0_0 = arith.constant 0 : index
    %0 = vector.load %arg1[%c0, %c0_0] : memref<16x16xf32, #tpu.memory_space<vmem>>, vector<16x16xf32>
    %c0_1 = arith.constant 0 : index
    %c0_2 = arith.constant 0 : index
    %1 = vector.load %arg2[%c0_1, %c0_2] : memref<16x128xf32, #tpu.memory_space<vmem>>, vector<16x128xf32>
    %cst = arith.constant dense<0.000000e+00> : vector<16x128xf32>
    %2 = tpu.matmul %0, %1, %cst {dimension_numbers = #tpu.dot_dimension_numbers<[1], [0], [0], [1], [0, 0, 1, 1], [], []>} : vector<16x16xf32>, vector<16x128xf32>, vector<16x128xf32> -> vector<16x128xf32>
    %c0_3 = arith.constant 0 : index
    %c0_4 = arith.constant 0 : index
    %3 = vector.load %arg3[%c0_3, %c0_4] : memref<16x128xf32, #tpu.memory_space<vmem>>, vector<16x128xf32>
    tpu.vector_store %arg3[%c0_3, %c0_4], %2 {strides = array<i32>} : memref<16x128xf32, #tpu.memory_space<vmem>>, vector<16x128xf32>,
    return
  }
  func.func @transform_0(%arg0: i32) -> (i32, i32) {
    %c0_i32 = arith.constant 0 : i32
    %c0_i32_0 = arith.constant 0 : i32
    %c0_i32_1 = arith.constant 0 : i32
    return %c0_i32, %c0_i32_0 : i32, i32
  }
  func.func @transform_1(%arg0: i32) -> (i32, i32) {
    %c0_i32 = arith.constant 0 : i32
    %c0_i32_0 = arith.constant 0 : i32
    return %c0_i32, %arg0 : i32, i32
  }
  func.func @transform_2(%arg0: i32) -> (i32, i32) {
    %c0_i32 = arith.constant 0 : i32
    %c0_i32_0 = arith.constant 0 : i32
    return %c0_i32, %arg0 : i32, i32
  }
}

</mosaic_0001>

<llo_original>
// kernel: impl.1
$region0: #{impl.1}
  #allocation0 [shape = 'u32[]', space=smem, size = 0x4, offset = 0x4, fixed_abs, tag = 'smem constant byte address 0x4 - core index']
  #allocation1 [shape = 'u32[72,128]{1,0:T(1,128)}', space=vmem, size = 0x9000, scoped, tag = 'internal scratch']
  %s0 = inlined_call_operand.vmem [shape: f32[16,16], index: 0, kind: input, shape index: {}]
  %s1 = inlined_call_operand.vmem [shape: f32[16,128], index: 1, kind: input, shape index: {}, may-alias: {1,2}]
  %s2 = inlined_call_operand.vmem [shape: f32[16,128], index: 2, kind: output, shape index: {}, may-alias: {1,2}]
  %s3 = sld [smem:[#allocation0]]
  $region18: #{impl.1} parent=0
    _
  %s5 = ssub.s32 1, %s3
  %s6 = scalar_select 0, %s5, %s3
  // Predicated region
  $region2: #{impl.1} parent=0 // pred_check
    _
  $region3: #{impl.1} parent=0 // pred_check_branch
    %8 = sbr.rel (0) target = $region5
  $region4: #{impl.1} parent=0 // pred_region
    _
  $region5: #{impl.1} parent=0 // pred_fallthru
    _
  // Predicated region
  $region6: #{impl.1} parent=0 // pred_check
    _
  $region7: #{impl.1} parent=0 // pred_check_branch
    %10 = sbr.rel (0) target = $region9
  $region8: #{impl.1} parent=0 // pred_region
    _
  $region9: #{impl.1} parent=0 // pred_fallthru
    _
  %v11 = vld [vmem:[%s0] sm:$0xff]
  %v12 = vld [vmem:[%s0 + $0x8] sm:$0xff]
  %v13 = vld [vmem:[%s1] sm:$0xff]
  %v14 = vld [vmem:[%s1 + $0x8] sm:$0xff]
  %vm15 = vcmask 130048
  %v17 = vsel %vm15, %v11, 0
  %v20 = vsel %vm15, %v12, 0
  %22 = vmatpush.msra.mxu0 0.0
  %23 = vmatpush.msra.mxu0 0.0
  %24 = vmatpush.msra.mxu0 0.0
  %25 = vmatpush.msra.mxu0 0.0
  %26 = vmatpush.msra.mxu0 0.0
  %27 = vmatpush.msra.mxu0 0.0
  %28 = vmatpush.msra.mxu0 0.0
  %29 = vmatpush.msra.mxu0 0.0
  %30 = vmatpush.msra.mxu0 0.0
  %31 = vmatpush.msra.mxu0 0.0
  %32 = vmatpush.msra.mxu0 0.0
  %33 = vmatpush.msra.mxu0 0.0
  %34 = vmatpush.msra.mxu0 0.0
  %35 = vmatpush.msra.mxu0 0.0
  %36 = vmatpush.msra.mxu0 %v14
  %37 = vmatpush.msra.mxu0 %v13
  %38 = vmatmul.f32.gmra.mxu0 %v17
  %v39 = vpop.f32.mrf.mxu0
  %v40 = vadd.f32 0.0, %v39
  %41 = vmatmul.f32.gmra.mxu0 %v20
  %v42 = vpop.f32.mrf.mxu0
  %v43 = vadd.f32 0.0, %v42
  %44 = vdwg.mxu0
  %45 = vst [vmem:[%s2] sm:$0xff] %v40
  %46 = vst [vmem:[%s2 + $0x8] sm:$0xff] %v43
  // Predicated region
  $region10: #{impl.1} parent=0 // pred_check
    _
  $region11: #{impl.1} parent=0 // pred_check_branch
    %48 = sbr.rel (0) target = $region13
  $region12: #{impl.1} parent=0 // pred_region
    _
  $region13: #{impl.1} parent=0 // pred_fallthru
    _
  // Predicated region
  $region14: #{impl.1} parent=0 // pred_check
    _
  $region15: #{impl.1} parent=0 // pred_check_branch
    %50 = sbr.rel (0) target = $region17
  $region16: #{impl.1} parent=0 // pred_region
    _
  $region17: #{impl.1} parent=0 // pred_fallthru
    _

</llo_original>
